<compile_context>
chip_gen: v6e
topology: v6e:2x2x1
jax: 0.10.0
libtpu: 0.0.40
codegen_flags: <defaults>
</compile_context>

<pallas_src>
import functools

import numpy as np
import jax
import jax.numpy as jnp
from jax.experimental import pallas as pl
from jax.experimental.pallas import tpu as pltpu


# ---------------------------------------------------------------------------
# Kernels
# ---------------------------------------------------------------------------

def _resident_kernel(w_ref, x_ref, b_ref, o_ref, *, bt):
    """Weight fully VMEM-resident; one (CO,I)x(I,Nt) matmul per batch row."""
    w = w_ref[...]                        # (CO, I)  resident
    b = b_ref[...]                        # (CO, 1)  f32, resident
    for bi in range(bt):                  # short static unroll over batch tile
        acc = jnp.dot(w, x_ref[bi], preferred_element_type=jnp.float32)
        o_ref[bi] = (acc + b).astype(o_ref.dtype)


def _ktiled_kernel(w_ref, x_ref, b_ref, o_ref, acc_ref, *, bt):
    """K-tiled fallback: weight streamed along I, f32 accumulator scratch."""
    k = pl.program_id(2)

    @pl.when(k == 0)
    def _():
        acc_ref[...] = jnp.zeros_like(acc_ref)

    w = w_ref[...]                        # (CO, tk)
    for bi in range(bt):
        acc_ref[bi] += jnp.dot(w, x_ref[bi], preferred_element_type=jnp.float32)

    @pl.when(k == pl.num_programs(2) - 1)
    def _():
        o_ref[...] = (acc_ref[...] + b_ref[...][None]).astype(o_ref.dtype)


# ---------------------------------------------------------------------------
# Tiling heuristics
# ---------------------------------------------------------------------------

def _vmem_budget():
    """(pipeline-block budget, vmem_limit cap) tuned per TPU generation."""
    try:
        phys = int(pltpu.get_tpu_info().vmem_capacity_bytes)
    except Exception:
        phys = 64 << 20                   # assume the smallest (v7x per-TC)
    if phys >= (96 << 20):                # v5e / v6e: 128 MiB physical VMEM
        return 56 << 20, phys - (24 << 20)
    # v7x: 64 MiB per TensorCore; leave headroom for Mosaic internal scratch.
    return 26 << 20, phys - (8 << 20)


def _vmem_limit(need, cap):
    want = max(int(need * 1.25) + (2 << 20), 16 << 20)
    return int(min(want, max(cap, int(need) + (2 << 20))))


def _pick_n_tile(N, cost_fn, budget):
    """Largest lane tile (full N, else a multiple of 128, prefer divisors)."""
    if cost_fn(N) <= budget:
        return N
    base = cost_fn(0)
    per128 = cost_fn(128) - base
    if per128 <= 0 or base + per128 > budget:
        return None
    cap = min((N // 128) * 128, 128 * int((budget - base) // per128))
    if cap < 128:
        return None
    d = cap
    while d >= max(128, cap // 2):        # prefer a divisor of N (lane-dense
        if N % d == 0:                    # last tile) but never shrink > 2x
            return d
        d -= 128
    return cap


# ---------------------------------------------------------------------------
# Wrapper
# ---------------------------------------------------------------------------

def shared_dot(weight, x, bias=None, *, squeeze=True,
               n_tile=None, b_tile=None, k_tile=None,
               compute_dtype=None, out_dtype=None):
    """weight: (C, O, I), x: (B, I, N), bias: (C, O) or None.

    compute_dtype: optional narrower dtype (e.g. jnp.bfloat16) for weight/x to
      halve HBM traffic; accumulation and bias stay f32 (numerics change vs.
      the f32 torch reference, so this is opt-in).
    Note: called eagerly here so the single-buffered-weight attempt can fall
      back cleanly if this JAX version rejects pipeline_mode=pl.Buffered(1).
    """
    C, O, I = weight.shape
    B, I2, N = x.shape
    assert I == I2, (I, I2)
    CO = C * O

    if out_dtype is None:
        out_dtype = x.dtype
    if compute_dtype is not None:
        weight = weight.astype(compute_dtype)
        x = x.astype(compute_dtype)

    w2 = weight.reshape(CO, I)            # fold C into the matmul M dim
    bias2 = (jnp.zeros((CO, 1), jnp.float32) if bias is None
             else bias.reshape(CO, 1).astype(jnp.float32))

    in_bytes = np.dtype(x.dtype).itemsize
    out_bytes = np.dtype(out_dtype).itemsize
    budget, limit_cap = _vmem_budget()

    # ---- VMEM cost models (bytes per grid step) ----------------------------
    def resident_cost(bt, nt):
        return (CO * I * in_bytes               # resident weight (1 buffer)
                + 2 * CO * 4                    # resident bias
                + 2 * bt * I * nt * in_bytes    # x block, double-buffered
                + 2 * bt * CO * nt * out_bytes  # out block, double-buffered
                + 2 * CO * nt * 4)              # f32 matmul temporaries

    def ktiled_cost(bt, nt, tk):
        return (2 * CO * tk * in_bytes          # streamed weight block
                + 2 * CO * 4
                + 2 * bt * tk * nt * in_bytes
                + 2 * bt * CO * nt * out_bytes
                + bt * CO * nt * 4              # f32 accumulator scratch
                + CO * nt * 4)                  # f32 matmul temporary

    # ---- choose resident-weight path vs. K-tiled fallback ------------------
    if k_tile is not None:
        k_tile = max(128, (int(k_tile) // 128) * 128)
    want_ktiled = k_tile is not None and k_tile < I
    if not want_ktiled and k_tile is None:
        if _pick_n_tile(N, lambda v: resident_cost(1, v), budget) is None and I >= 128:
            want_ktiled = True          # resident weight does not fit VMEM
        # TODO(synk): also tile CO for the (huge CO, I < 128) corner case.

    out_shape = jax.ShapeDtypeStruct((B, CO, N), out_dtype)
    flops = 2 * B * CO * I * N

    if not want_ktiled:
        # ----------------------- resident-weight path -----------------------
        if n_tile is not None:
            nt = int(n_tile)
            nt = N if nt >= N else max(128, (nt // 128) * 128)
        else:
            nt = _pick_n_tile(N, lambda v: resident_cost(1, v), budget)
            if nt is None:              # best-effort (see TODO above)
                nt = N if N <= 128 else 128
        if b_tile is not None:
            bt = max(1, min(int(b_tile), B))
        else:
            bt = 1                      # fold batches while per-step work small
            while (bt < min(B, 8) and bt * nt < 1024 and B % (bt * 2) == 0
                   and resident_cost(bt * 2, nt) <= budget):
                bt *= 2
        # keep >= 2 parallel grid steps so both v7x TensorCores get work
        if pl.cdiv(B, bt) * pl.cdiv(N, nt) < 2:
            if B >= 2:
                bt = max(1, bt // 2)
            elif N >= 256:
                nt = 128 * ((N // 2 + 127) // 128)

        grid = (pl.cdiv(B, bt), pl.cdiv(N, nt))
        need = resident_cost(bt, nt)
        cost = pl.CostEstimate(
            flops=flops, transcendentals=0,
            bytes_accessed=(B * I * N * in_bytes + CO * I * in_bytes
                            + B * CO * N * out_bytes + CO * 4))

        def call(single_buffer):
            def res_spec(shape, imap):
                if single_buffer:
                    return pl.BlockSpec(shape, imap, pipeline_mode=pl.Buffered(1))
                return pl.BlockSpec(shape, imap)
            w_spec = res_spec((CO, I), lambda b, n: (0, 0))
            b_spec = res_spec((CO, 1), lambda b, n: (0, 0))
            x_spec = pl.BlockSpec((bt, I, nt), lambda b, n: (b, 0, n))
            o_spec = pl.BlockSpec((bt, CO, nt), lambda b, n: (b, 0, n))
            vneed = need if single_buffer else need + CO * I * in_bytes
            return pl.pallas_call(
                functools.partial(_resident_kernel, bt=bt),
                out_shape=out_shape,
                grid=grid,
                in_specs=[w_spec, x_spec, b_spec],
                out_specs=o_spec,
                compiler_params=pltpu.CompilerParams(
                    dimension_semantics=("parallel", "parallel"),
                    vmem_limit_bytes=_vmem_limit(vneed, limit_cap)),
                cost_estimate=cost,
            )(w2, x, bias2)

        try:
            out = call(True)            # single-buffer the resident weight/bias
        except Exception:               # pipeline_mode=Buffered(1) unsupported
            out = call(False)
    else:
        # ------------------------ K-tiled fallback --------------------------
        i_pad128 = 128 * pl.cdiv(I, 128)
        if k_tile is not None:
            tk = min(k_tile, i_pad128)
        else:
            tk = 128
            for cand in (512, 384, 256):
                if i_pad128 % cand == 0 and ktiled_cost(1, 128, cand) <= budget:
                    tk = cand
                    break
        i_padded = tk * pl.cdiv(I, tk)
        if i_padded != I:               # zero-pad the contraction axis
            w2 = jnp.pad(w2, ((0, 0), (0, i_padded - I)))
            x = jnp.pad(x, ((0, 0), (0, i_padded - I), (0, 0)))

        if n_tile is not None:
            nt = int(n_tile)
            nt = N if nt >= N else max(128, (nt // 128) * 128)
        else:
            nt = _pick_n_tile(N, lambda v: ktiled_cost(1, v, tk), budget)
            if nt is None:
                nt = N if N <= 128 else 128
        if b_tile is not None:
            bt = max(1, min(int(b_tile), B))
        else:
            bt = 1
            while (bt < min(B, 8) and bt * nt < 1024 and B % (bt * 2) == 0
                   and ktiled_cost(bt * 2, nt, tk) <= budget):
                bt *= 2
        if pl.cdiv(B, bt) * pl.cdiv(N, nt) < 2:
            if B >= 2:
                bt = max(1, bt // 2)
            elif N >= 256:
                nt = 128 * ((N // 2 + 127) // 128)

        grid = (pl.cdiv(B, bt), pl.cdiv(N, nt), i_padded // tk)
        need = ktiled_cost(bt, nt, tk)
        cost = pl.CostEstimate(
            flops=flops, transcendentals=0,
            bytes_accessed=(B * i_padded * N * in_bytes
                            + grid[0] * grid[1] * CO * i_padded * in_bytes
                            + B * CO * N * out_bytes + CO * 4))

        out = pl.pallas_call(
            functools.partial(_ktiled_kernel, bt=bt),
            out_shape=out_shape,
            grid=grid,
            in_specs=[
                pl.BlockSpec((CO, tk), lambda b, n, k: (0, k)),
                pl.BlockSpec((bt, tk, nt), lambda b, n, k: (b, k, n)),
                pl.BlockSpec((CO, 1), lambda b, n, k: (0, 0)),
            ],
            out_specs=pl.BlockSpec((bt, CO, nt), lambda b, n, k: (b, 0, n)),
            scratch_shapes=[pltpu.VMEM((bt, CO, nt), jnp.float32)],
            compiler_params=pltpu.CompilerParams(
                dimension_semantics=("parallel", "parallel", "arbitrary"),
                vmem_limit_bytes=_vmem_limit(need, limit_cap)),
            cost_estimate=cost,
        )(w2, x, bias2)

    out = out.reshape(B, C, O, N)       # un-fold C outside the kernel
    # torch's output.squeeze_(1): only removes dim 1 if n_channels == 1
    if squeeze and C == 1:
        out = out[:, 0]
    return out


def init_shared_dot_params(key, in_features, out_features, n_channels,
                           bias=False, init_weight=None, init_bias=None):
    """Deterministic parameter init mirroring SharedDot.reset_parameters."""
    kw, _ = jax.random.split(key)
    if init_weight:
        bound = float(init_weight)
    else:
        # kaiming_uniform_(a=0): gain=sqrt(2), fan_in = out_features * in_features
        fan_in = out_features * in_features
        bound = (2.0 ** 0.5) * (3.0 / fan_in) ** 0.5
    weight = jax.random.uniform(
        kw, (n_channels, out_features, in_features),
        minval=-bound, maxval=bound, dtype=jnp.float32)
    b = None
    if bias:
        b = jnp.full((n_channels, out_features),
                     float(init_bias) if init_bias else 0.0, dtype=jnp.float32)
    return weight, b


if __name__ == "__main__":
    key = jax.random.PRNGKey(0)
    k_param, k_x = jax.random.split(key)
    HIGH = jax.lax.Precision.HIGHEST

    # Case 1: bias, C > 1 -- matches the torch module (f32 end to end).
    B, C, I, O, N = 2, 4, 32, 16, 128
    weight, bias = init_shared_dot_params(
        k_param, in_features=I, out_features=O, n_channels=C,
        bias=True, init_bias=0.25)
    x = jax.random.normal(k_x, (B, I, N), dtype=jnp.float32)
    out = jax.block_until_ready(shared_dot(weight, x, bias))
    ref = (jnp.einsum("coi,bin->bcon", weight, x, precision=HIGH)
           + bias[None, :, :, None])
    assert out.shape == ref.shape, (out.shape, ref.shape)
    assert jnp.allclose(out, ref, atol=1e-4, rtol=1e-4)

    # Case 2: no bias, C == 1 -> output dim 1 squeezed.
    w1, _ = init_shared_dot_params(k_param, in_features=I, out_features=O,
                                   n_channels=1, bias=False)
    out2 = jax.block_until_ready(shared_dot(w1, x, None))
    ref2 = jnp.einsum("coi,bin->bcon", w1, x, precision=HIGH)[:, 0]
    assert out2.shape == ref2.shape
    assert jnp.allclose(out2, ref2, atol=1e-4, rtol=1e-4)

    # Case 3: N-tiled grid + batch folding (B=8, N=256, n_tile=128).
    B3, N3 = 8, 256
    x3 = jax.random.normal(jax.random.PRNGKey(3), (B3, I, N3), dtype=jnp.float32)
    out3 = jax.block_until_ready(shared_dot(weight, x3, bias, n_tile=128))
    ref3 = (jnp.einsum("coi,bin->bcon", weight, x3, precision=HIGH)
            + bias[None, :, :, None])
    assert out3.shape == ref3.shape
    assert jnp.allclose(out3, ref3, atol=1e-4, rtol=1e-4)

    # Case 4: K-tiled fallback path (contraction axis streamed, I=256, tk=128).
    I4 = 256
    w4, b4 = init_shared_dot_params(k_param, in_features=I4, out_features=O,
                                    n_channels=C, bias=True, init_bias=0.1)
    x4 = jax.random.normal(jax.random.PRNGKey(4), (B, I4, N), dtype=jnp.float32)
    out4 = jax.block_until_ready(shared_dot(w4, x4, b4, k_tile=128))
    ref4 = (jnp.einsum("coi,bin->bcon", w4, x4, precision=HIGH)
            + b4[None, :, :, None])
    assert out4.shape == ref4.shape
    assert jnp.allclose(out4, ref4, atol=1e-4, rtol=1e-4)

    # Case 5: opt-in bf16 compute (f32 accumulation) -- looser tolerance.
    out5 = jax.block_until_ready(
        shared_dot(weight, x, bias, compute_dtype=jnp.bfloat16))
    assert jnp.allclose(out5, ref, atol=3e-2, rtol=3e-2)

    print("KERNEL_OK")
</pallas_src>

<mosaic_0001>
module attributes {stable_mosaic.version = 11 : i64} {
  func.func @_resident_kernel(%arg0: i32, %arg1: i32, %arg2: memref<64x32xf32, #tpu.memory_space<vmem>>, %arg3: memref<1x32x128xf32, #tpu.memory_space<vmem>>, %arg4: memref<64x1xf32, #tpu.memory_space<vmem>>, %arg5: memref<1x64x128xf32, #tpu.memory_space<vmem>>) attributes {dimension_semantics = [#tpu.dimension_semantics<parallel>, #tpu.dimension_semantics<parallel>], iteration_bounds = array<i64: 2, 1>, scalar_prefetch = 0 : i64, scratch_operands = 0 : i64, tpu.core_type = #tpu.core_type<tc>, window_params = [{pipeline_mode = #tpu.pipeline_mode<synchronous>, transform_indices = @transform_0, window_bounds = array<i64: 64, 32>}, {transform_indices = @transform_1, window_bounds = array<i64: 1, 32, 128>}, {pipeline_mode = #tpu.pipeline_mode<synchronous>, transform_indices = @transform_2, window_bounds = array<i64: 64, 1>}, {transform_indices = @transform_3, window_bounds = array<i64: 1, 64, 128>}]} {
    %c0 = arith.constant 0 : index
    %c0_0 = arith.constant 0 : index
    %0 = vector.load %arg2[%c0, %c0_0] : memref<64x32xf32, #tpu.memory_space<vmem>>, vector<64x32xf32>
    %c0_1 = arith.constant 0 : index
    %c0_2 = arith.constant 0 : index
    %1 = vector.load %arg4[%c0_1, %c0_2] : memref<64x1xf32, #tpu.memory_space<vmem>>, vector<64x1xf32>
    %c0_3 = arith.constant 0 : index
    %c0_4 = arith.constant 0 : index
    %c0_5 = arith.constant 0 : index
    %2 = vector.load %arg3[%c0_3, %c0_4, %c0_5] : memref<1x32x128xf32, #tpu.memory_space<vmem>>, vector<1x32x128xf32>
    %3 = vector.shape_cast %2 : vector<1x32x128xf32> to vector<32x128xf32>
    %cst = arith.constant dense<0.000000e+00> : vector<64x128xf32>
    %4 = tpu.matmul %0, %3, %cst {dimension_numbers = #tpu.dot_dimension_numbers<[1], [0], [0], [1], [0, 0, 1, 1], [], []>} : vector<64x32xf32>, vector<32x128xf32>, vector<64x128xf32> -> vector<64x128xf32>
    %5 = vector.broadcast %1 : vector<64x1xf32> to vector<64x128xf32>
    %6 = arith.addf %4, %5 : vector<64x128xf32>
    %c0_6 = arith.constant 0 : index
    %c0_7 = arith.constant 0 : index
    %c0_8 = arith.constant 0 : index
    %7 = vector.load %arg5[%c0_6, %c0_7, %c0_8] : memref<1x64x128xf32, #tpu.memory_space<vmem>>, vector<1x64x128xf32>
    %8 = vector.shape_cast %7 : vector<1x64x128xf32> to vector<64x128xf32>
    %9 = vector.shape_cast %6 : vector<64x128xf32> to vector<1x64x128xf32>
    tpu.vector_store %arg5[%c0_6, %c0_7, %c0_8], %9 {strides = array<i32>} : memref<1x64x128xf32, #tpu.memory_space<vmem>>, vector<1x64x128xf32>,
    return
  }
  func.func @transform_0(%arg0: i32, %arg1: i32) -> (i32, i32) {
    %c0_i32 = arith.constant 0 : i32
    %c0_i32_0 = arith.constant 0 : i32
    %c0_i32_1 = arith.constant 0 : i32
    return %c0_i32, %c0_i32_0 : i32, i32
  }
  func.func @transform_1(%arg0: i32, %arg1: i32) -> (i32, i32, i32) {
    %c0_i32 = arith.constant 0 : i32
    %c0_i32_0 = arith.constant 0 : i32
    return %arg0, %c0_i32, %arg1 : i32, i32, i32
  }
  func.func @transform_2(%arg0: i32, %arg1: i32) -> (i32, i32) {
    %c0_i32 = arith.constant 0 : i32
    %c0_i32_0 = arith.constant 0 : i32
    %c0_i32_1 = arith.constant 0 : i32
    return %c0_i32, %c0_i32_0 : i32, i32
  }
  func.func @transform_3(%arg0: i32, %arg1: i32) -> (i32, i32, i32) {
    %c0_i32 = arith.constant 0 : i32
    %c0_i32_0 = arith.constant 0 : i32
    return %arg0, %c0_i32, %arg1 : i32, i32, i32
  }
}

module attributes {stable_mosaic.version = 11 : i64} {
  func.func @_resident_kernel(%arg0: i32, %arg1: i32, %arg2: memref<64x32xf32, #tpu.memory_space<vmem>>, %arg3: memref<1x32x128xf32, #tpu.memory_space<vmem>>, %arg4: memref<64x1xf32, #tpu.memory_space<vmem>>, %arg5: memref<1x64x128xf32, #tpu.memory_space<vmem>>) attributes {dimension_semantics = [#tpu.dimension_semantics<parallel>, #tpu.dimension_semantics<parallel>], iteration_bounds = array<i64: 2, 1>, scalar_prefetch = 0 : i64, scratch_operands = 0 : i64, tpu.core_type = #tpu.core_type<tc>, window_params = [{pipeline_mode = #tpu.pipeline_mode<synchronous>, transform_indices = @transform_0, window_bounds = array<i64: 64, 32>}, {transform_indices = @transform_1, window_bounds = array<i64: 1, 32, 128>}, {pipeline_mode = #tpu.pipeline_mode<synchronous>, transform_indices = @transform_2, window_bounds = array<i64: 64, 1>}, {transform_indices = @transform_3, window_bounds = array<i64: 1, 64, 128>}]} {
    %c0 = arith.constant 0 : index
    %c0_0 = arith.constant 0 : index
    %0 = vector.load %arg2[%c0, %c0_0] : memref<64x32xf32, #tpu.memory_space<vmem>>, vector<64x32xf32>
    %c0_1 = arith.constant 0 : index
    %c0_2 = arith.constant 0 : index
    %1 = vector.load %arg4[%c0_1, %c0_2] : memref<64x1xf32, #tpu.memory_space<vmem>>, vector<64x1xf32>
    %c0_3 = arith.constant 0 : index
    %c0_4 = arith.constant 0 : index
    %c0_5 = arith.constant 0 : index
    %2 = vector.load %arg3[%c0_3, %c0_4, %c0_5] : memref<1x32x128xf32, #tpu.memory_space<vmem>>, vector<1x32x128xf32>
    %3 = vector.shape_cast %2 : vector<1x32x128xf32> to vector<32x128xf32>
    %cst = arith.constant dense<0.000000e+00> : vector<64x128xf32>
    %4 = tpu.matmul %0, %3, %cst {dimension_numbers = #tpu.dot_dimension_numbers<[1], [0], [0], [1], [0, 0, 1, 1], [], []>} : vector<64x32xf32>, vector<32x128xf32>, vector<64x128xf32> -> vector<64x128xf32>
    %5 = vector.broadcast %1 : vector<64x1xf32> to vector<64x128xf32>
    %6 = arith.addf %4, %5 : vector<64x128xf32>
    %c0_6 = arith.constant 0 : index
    %c0_7 = arith.constant 0 : index
    %c0_8 = arith.constant 0 : index
    %7 = vector.load %arg5[%c0_6, %c0_7, %c0_8] : memref<1x64x128xf32, #tpu.memory_space<vmem>>, vector<1x64x128xf32>
    %8 = vector.shape_cast %7 : vector<1x64x128xf32> to vector<64x128xf32>
    %9 = vector.shape_cast %6 : vector<64x128xf32> to vector<1x64x128xf32>
    tpu.vector_store %arg5[%c0_6, %c0_7, %c0_8], %9 {strides = array<i32>} : memref<1x64x128xf32, #tpu.memory_space<vmem>>, vector<1x64x128xf32>,
    return
  }
  func.func @transform_0(%arg0: i32, %arg1: i32) -> (i32, i32) {
    %c0_i32 = arith.constant 0 : i32
    %c0_i32_0 = arith.constant 0 : i32
    %c0_i32_1 = arith.constant 0 : i32
    return %c0_i32, %c0_i32_0 : i32, i32
  }
  func.func @transform_1(%arg0: i32, %arg1: i32) -> (i32, i32, i32) {
    %c0_i32 = arith.constant 0 : i32
    %c0_i32_0 = arith.constant 0 : i32
    return %arg0, %c0_i32, %arg1 : i32, i32, i32
  }
  func.func @transform_2(%arg0: i32, %arg1: i32) -> (i32, i32) {
    %c0_i32 = arith.constant 0 : i32
    %c0_i32_0 = arith.constant 0 : i32
    %c0_i32_1 = arith.constant 0 : i32
    return %c0_i32, %c0_i32_0 : i32, i32
  }
  func.func @transform_3(%arg0: i32, %arg1: i32) -> (i32, i32, i32) {
    %c0_i32 = arith.constant 0 : i32
    %c0_i32_0 = arith.constant 0 : i32
    return %arg0, %c0_i32, %arg1 : i32, i32, i32
  }
}

</mosaic_0001>

<llo_original>
// kernel: tpu_custom_call.1
$region0: #{tpu_custom_call.1}
  #allocation0 [shape = 'u32[]', space=smem, size = 0x4, offset = 0x4, fixed_abs, tag = 'smem constant byte address 0x4 - core index']
  #allocation1 [shape = 'u32[144,128]{1,0:T(1,128)}', space=vmem, size = 0x12000, scoped, tag = 'internal scratch']
  %s0 = inlined_call_operand.vmem [shape: f32[64,32], index: 0, kind: input, shape index: {}]
  %s1 = inlined_call_operand.vmem [shape: f32[2,32,128], index: 1, kind: input, shape index: {}]
  %s2 = inlined_call_operand.vmem [shape: f32[64,1], index: 2, kind: input, shape index: {}]
  %s3 = inlined_call_operand.hbm [shape: f32[2,64,128], index: 3, kind: output, shape index: {}]
  %s4 = sld [smem:[#allocation0]]
  $region45: #{tpu_custom_call.1} parent=0
    _
  %s6 = ssub.s32 1, %s4
  %s7 = scalar_select 0, %s6, %s4
  $region1: #{tpu_custom_call.1} parent=0
    #allocation2 [shape = 'u8[65536]{0}', space=vmem, size = 0x10000, scoped, tag = 'output window, operand 0']
    #allocation3 [shape = 's32[2]{0}', space=sflag, size = 0x8, scoped, tag = 'scoped memory for tpu_custom_call.1']
    %8 = vsyncpa [#allocation3], 0
    %s9 = scalar_lea.sflag [#allocation3], 1
    %10 = vsyncpa %s9, 0
    loop: start=0, step=1, limit=4
    $region2: #{tpu_custom_call.1} parent=1 // loop_pre_header
      _
    $region3: #{tpu_custom_call.1} parent=1 // loop_header
      %s12 = sphi 0, %s16
      %p13 = scmp.ge.s32.totalorder %s12, 4
      %s19 = sphi 0, %s31
      %s20 = sphi 0, %s27
      %s21 = sphi 0, %s19
      %s22 = sphi 0, %s20
      %s23 = sphi 0, %s21
      %s24 = sphi 0, %s22
      %s32 = sphi 0, %s32
      %s34 = sphi 0, %s32
      %s35 = sphi 0, %s34
      %s49 = sphi 0, %s35
      %s57 = sphi 0, %s59
      %s60 = sphi 0, %s57
      %s61 = sphi 0, %s60
      %s77 = sphi 0, %s61
      %s81 = sphi 0, %s81
      %s83 = sphi 0, %s81
      %s84 = sphi 0, %s83
      %s98 = sphi 0, %s84
      %s106 = sphi 0, %s108
      %s109 = sphi 0, %s106
      %s110 = sphi 0, %s109
      %s126 = sphi 0, %s110
    $region4: #{tpu_custom_call.1} parent=1 // loop_header_branch
      %15 = sbr.rel (%p13) target = $region8
    $region5: #{tpu_custom_call.1} parent=1 // loop_body
      %s17 = ssub.s32 %s12, 1
      %s18 = ssub.s32 %s12, 2
      %s25 = sadd.s32 1, %s20
      %p26 = scmp.ge.s32.totalorder %s25, 1
      %s27 = scalar_select %p26, 0, %s25
      %s28 = sadd.s32 1, %s19
      %s29 = scalar_select %p26, %s28, %s19
      %p30 = scmp.ge.s32.totalorder %s29, 2
      %s31 = scalar_select %p30, 0, %s29
      %s33 = sadd.s32 %s32, 1
      %p36 = scmp.eq.s32.totalorder %s12, 1
      %p37 = scmp.ne.s32.totalorder %s32, %s34
      %p38 = scmp.eq.s32.totalorder %s12, 0
      %p39 = por %p37, %p38
      %p40 = scmp.ne.s32.totalorder %s32, %s34
      %p41 = scmp.eq.s32.totalorder %s17, 1
      %p42 = por %p40, %p41
      %p43 = scmp.ne.s32.totalorder %s34, %s35
      %p44 = scmp.eq.s32.totalorder %s17, 0
      %p45 = por %p43, %p44
      %p46 = scmp.ne.s32.totalorder %s34, %s35
      %p47 = scmp.eq.s32.totalorder %s18, 1
      %p48 = por %p46, %p47
      %p50 = scmp.ne.s32.totalorder %s35, %s49
      %p51 = scmp.eq.s32.totalorder %s18, 0
      %p52 = por %p50, %p51
      %s53 = ssub.s32 %s19, %s31
      %s54 = ssub.s32 %s20, %s27
      %s55 = sor.u32 %s53, %s54
      %p56 = scmp.eq.s32.totalorder %s55, 0
      %s58 = sadd.s32 %s57, 1
      %s59 = scalar_select %p56, %s57, %s58
      %p62 = pneg %p56
      %p63 = scmp.eq.s32.totalorder %s12, 1
      %p64 = por %p62, %p63
      %p65 = scmp.ne.s32.totalorder %s57, %s60
      %p66 = scmp.eq.s32.totalorder %s12, 0
      %p67 = por %p65, %p66
      %p68 = scmp.ne.s32.totalorder %s57, %s60
      %p69 = scmp.eq.s32.totalorder %s17, 1
      %p70 = por %p68, %p69
      %p71 = scmp.ne.s32.totalorder %s60, %s61
      %p72 = scmp.eq.s32.totalorder %s17, 0
      %p73 = por %p71, %p72
      %p74 = scmp.ne.s32.totalorder %s60, %s61
      %p75 = scmp.eq.s32.totalorder %s18, 1
      %p76 = por %p74, %p75
      %p78 = scmp.ne.s32.totalorder %s61, %s77
      %p79 = scmp.eq.s32.totalorder %s18, 0
      %p80 = por %p78, %p79
      %s82 = sadd.s32 %s81, 1
      %p85 = scmp.eq.s32.totalorder %s12, 1
      %p86 = scmp.ne.s32.totalorder %s81, %s83
      %p87 = scmp.eq.s32.totalorder %s12, 0
      %p88 = por %p86, %p87
      %p89 = scmp.ne.s32.totalorder %s81, %s83
      %p90 = scmp.eq.s32.totalorder %s17, 1
      %p91 = por %p89, %p90
      %p92 = scmp.ne.s32.totalorder %s83, %s84
      %p93 = scmp.eq.s32.totalorder %s17, 0
      %p94 = por %p92, %p93
      %p95 = scmp.ne.s32.totalorder %s83, %s84
      %p96 = scmp.eq.s32.totalorder %s18, 1
      %p97 = por %p95, %p96
      %p99 = scmp.ne.s32.totalorder %s84, %s98
      %p100 = scmp.eq.s32.totalorder %s18, 0
      %p101 = por %p99, %p100
      %s102 = ssub.s32 %s19, %s31
      %s103 = ssub.s32 %s20, %s27
      %s104 = sor.u32 %s102, %s103
      %p105 = scmp.eq.s32.totalorder %s104, 0
      %s107 = sadd.s32 %s106, 1
      %s108 = scalar_select %p105, %s106, %s107
      %p111 = pneg %p105
      %p112 = scmp.eq.s32.totalorder %s12, 1
      %p113 = por %p111, %p112
      %p114 = scmp.ne.s32.totalorder %s106, %s109
      %p115 = scmp.eq.s32.totalorder %s12, 0
      %p116 = por %p114, %p115
      %p117 = scmp.ne.s32.totalorder %s106, %s109
      %p118 = scmp.eq.s32.totalorder %s17, 1
      %p119 = por %p117, %p118
      %p120 = scmp.ne.s32.totalorder %s109, %s110
      %p121 = scmp.eq.s32.totalorder %s17, 0
      %p122 = por %p120, %p121
      %p123 = scmp.ne.s32.totalorder %s109, %s110
      %p124 = scmp.eq.s32.totalorder %s18, 1
      %p125 = por %p123, %p124
      %p127 = scmp.ne.s32.totalorder %s110, %s126
      %p128 = scmp.eq.s32.totalorder %s18, 0
      %p129 = por %p127, %p128
      %p130 = scmp.le.s32.totalorder 1, %s12
      %p131 = scmp.lt.s32.totalorder %s12, 3
      %p132 = pnand %p130, %p131
      %p133 = pneg %p132
      // Predicated region
      $region9: #{tpu_custom_call.1} parent=5 // pred_check
        _
      $region10: #{tpu_custom_call.1} parent=5 // pred_check_branch
        %135 = sbr.rel (%p132) target = $region12
      $region11: #{tpu_custom_call.1} parent=5 // pred_region
        %s136 = ssub.s32 %s12, 1
        // Predicated region
        $region13: #{tpu_custom_call.1} parent=11 // pred_check
          %p137 = pneg %p45
        $region14: #{tpu_custom_call.1} parent=11 // pred_check_branch
          %139 = sbr.rel (%p137) target = $region16
        $region15: #{tpu_custom_call.1} parent=11 // pred_region
          _
        $region16: #{tpu_custom_call.1} parent=11 // pred_fallthru
          _
        // Predicated region
        $region17: #{tpu_custom_call.1} parent=11 // pred_check
          %p140 = pneg %p94
        $region18: #{tpu_custom_call.1} parent=11 // pred_check_branch
          %142 = sbr.rel (%p140) target = $region20
        $region19: #{tpu_custom_call.1} parent=11 // pred_region
          _
        $region20: #{tpu_custom_call.1} parent=11 // pred_fallthru
          _
      $region12: #{tpu_custom_call.1} parent=5 // pred_fallthru
        _
      %p143 = scmp.lt.s32.totalorder %s12, 2
      // Predicated region
      $region21: #{tpu_custom_call.1} parent=5 // pred_check
        %p144 = pneg %p143
      $region22: #{tpu_custom_call.1} parent=5 // pred_check_branch
        %146 = sbr.rel (%p144) target = $region24
      $region23: #{tpu_custom_call.1} parent=5 // pred_region
        // Predicated region
        $region25: #{tpu_custom_call.1} parent=23 // pred_check
          %p147 = pneg %p67
        $region26: #{tpu_custom_call.1} parent=23 // pred_check_branch
          %149 = sbr.rel (%p147) target = $region28
        $region27: #{tpu_custom_call.1} parent=23 // pred_region
          %p150 = scmp.lt.s32.totalorder %s19, 1
          %s151 = scalar_select %p150, %s19, 1
          %p152 = scmp.lt.s32.totalorder %s20, 0
          %s153 = scalar_select %p152, %s20, 0
          %s154 = smul.addr %s151, 4
          %s155 = sadd.s32 %s153, %s154
          %s156 = smul.addr %s155, 8
          %s157 = scalar_lea.vmem %s1, %s156
        $region28: #{tpu_custom_call.1} parent=23 // pred_fallthru
          _
      $region24: #{tpu_custom_call.1} parent=5 // pred_fallthru
        _
      %p158 = scmp.le.s32.totalorder 1, %s12
      %p159 = scmp.lt.s32.totalorder %s12, 3
      %p160 = pnand %p158, %p159
      %p161 = pneg %p160
      // Predicated region
      $region29: #{tpu_custom_call.1} parent=5 // pred_check
        _
      $region30: #{tpu_custom_call.1} parent=5 // pred_check_branch
        %163 = sbr.rel (%p160) target = $region32
      $region31: #{tpu_custom_call.1} parent=5 // pred_region
        %s164 = ssub.s32 %s12, 1
        %p165 = pneg %p45
        %p166 = pneg %p42
        %p167 = scmp.lt.s32.totalorder %s21, 1
        %s168 = scalar_select %p167, %s21, 1
        %p169 = scmp.lt.s32.totalorder %s22, 0
        %s170 = scalar_select %p169, %s22, 0
        %s171 = smul.addr %s168, 4
        %s172 = sadd.s32 %s170, %s171
        %s173 = smul.addr %s172, 8
        %s174 = scalar_lea.vmem %s1, %s173
        %p175 = pneg %p73
        %p176 = pneg %p70
        %p177 = pneg %p94
        %p178 = pneg %p91
        %p179 = pneg %p122
        %p180 = pneg %p119
        %s181 = sand.u32 %s109, 1
        %s182 = scalar_lea.sflag [#allocation3], %s181
        %s183 = sand.u32 %s109, 1
        %s184 = smul.addr %s183, 64
        %s185 = scalar_lea.vmem [#allocation2], %s184
        %p186 = scmp.lt.s32.totalorder %s21, 1
        %s187 = scalar_select %p186, %s21, 1
        %p188 = scmp.lt.s32.totalorder %s22, 0
        %s189 = scalar_select %p188, %s22, 0
        %s190 = smul.addr %s187, 4
        %s191 = sadd.s32 %s189, %s190
        %s192 = smul.addr %s191, 8
        %s193 = scalar_lea.vmem %s1, %s192
        %v194 = vld [vmem:[%s0] sm:$0xff]
        %v195 = vld [vmem:[%s0 + $0x8] sm:$0xff]
        %v196 = vld [vmem:[%s0 + $0x10] sm:$0xff]
        %v197 = vld [vmem:[%s0 + $0x18] sm:$0xff]
        %v198 = vld [vmem:[%s0 + $0x20] sm:$0xff]
        %v199 = vld [vmem:[%s0 + $0x28] sm:$0xff]
        %v200 = vld [vmem:[%s0 + $0x30] sm:$0xff]
        %v201 = vld [vmem:[%s0 + $0x38] sm:$0xff]
        %v202 = vld [vmem:[%s2] sm:$0xff]
        %v203 = vld [vmem:[%s2 + $0x8] sm:$0xff]
        %v204 = vld [vmem:[%s2 + $0x10] sm:$0xff]
        %v205 = vld [vmem:[%s2 + $0x18] sm:$0xff]
        %v206 = vld [vmem:[%s2 + $0x20] sm:$0xff]
        %v207 = vld [vmem:[%s2 + $0x28] sm:$0xff]
        %v208 = vld [vmem:[%s2 + $0x30] sm:$0xff]
        %v209 = vld [vmem:[%s2 + $0x38] sm:$0xff]
        %v210 = vld [vmem:[%s193] sm:$0xff]
        %v211 = vld [vmem:[%s193 + $0x8] sm:$0xff]
        %v212 = vld [vmem:[%s193 + $0x10] sm:$0xff]
        %v213 = vld [vmem:[%s193 + $0x18] sm:$0xff]
        %215 = vset.pattern.permute.xlu0 0
        %216 = vperm.xlu0 %215, %v202
        %v217 = vpop.permute.xlu0 %216
        %220 = vset.pattern.permute.xlu0 0
        %221 = vperm.xlu0 %220, %v203
        %v222 = vpop.permute.xlu0 %221
        %225 = vset.pattern.permute.xlu0 0
        %226 = vperm.xlu0 %225, %v204
        %v227 = vpop.permute.xlu0 %226
        %230 = vset.pattern.permute.xlu0 0
        %231 = vperm.xlu0 %230, %v205
        %v232 = vpop.permute.xlu0 %231
        %235 = vset.pattern.permute.xlu0 0
        %236 = vperm.xlu0 %235, %v206
        %v237 = vpop.permute.xlu0 %236
        %240 = vset.pattern.permute.xlu0 0
        %241 = vperm.xlu0 %240, %v207
        %v242 = vpop.permute.xlu0 %241
        %245 = vset.pattern.permute.xlu0 0
        %246 = vperm.xlu0 %245, %v208
        %v247 = vpop.permute.xlu0 %246
        %250 = vset.pattern.permute.xlu0 0
        %251 = vperm.xlu0 %250, %v209
        %v252 = vpop.permute.xlu0 %251
        %vm254 = vcmask 261120
        %v256 = vsel %vm254, %v194, 0
        %v259 = vsel %vm254, %v195, 0
        %v262 = vsel %vm254, %v196, 0
        %v265 = vsel %vm254, %v197, 0
        %v268 = vsel %vm254, %v198, 0
        %v271 = vsel %vm254, %v199, 0
        %v274 = vsel %vm254, %v200, 0
        %v277 = vsel %vm254, %v201, 0
        %279 = vmatprep.subr.mxu0 0.0
        %280 = vmatpush1.msra.mxu0 0.0
        %281 = vmatprep.subr.mxu0 0.0
        %282 = vmatpush1.msra.mxu0 0.0
        %283 = vmatprep.subr.mxu0 0.0
        %284 = vmatpush1.msra.mxu0 0.0
        %285 = vmatprep.subr.mxu0 0.0
        %286 = vmatpush1.msra.mxu0 0.0
        %287 = vmatprep.subr.mxu0 0.0
        %288 = vmatpush1.msra.mxu0 0.0
        %289 = vmatprep.subr.mxu0 0.0
        %290 = vmatpush1.msra.mxu0 0.0
        %291 = vmatprep.subr.mxu0 0.0
        %292 = vmatpush1.msra.mxu0 0.0
        %293 = vmatprep.subr.mxu0 0.0
        %294 = vmatpush1.msra.mxu0 0.0
        %295 = vmatprep.subr.mxu0 0.0
        %296 = vmatpush1.msra.mxu0 0.0
        %297 = vmatprep.subr.mxu0 0.0
        %298 = vmatpush1.msra.mxu0 0.0
        %299 = vmatprep.subr.mxu0 0.0
        %300 = vmatpush1.msra.mxu0 0.0
        %301 = vmatprep.subr.mxu0 0.0
        %302 = vmatpush1.msra.mxu0 0.0
        %303 = vmatprep.subr.mxu0 0.0
        %304 = vmatpush1.msra.mxu0 %v213
        %305 = vmatprep.subr.mxu0 0.0
        %306 = vmatpush1.msra.mxu0 %v212
        %307 = vmatprep.subr.mxu0 0.0
        %308 = vmatpush1.msra.mxu0 %v211
        %309 = vmatprep.subr.mxu0 0.0
        %310 = vmatpush1.msra.mxu0 %v210
        %311 = vmatprep.subr.mxu0 0.0
        %312 = vmatpush2.msra.mxu0 0.0
        %313 = vmatprep.subr.mxu0 0.0
        %314 = vmatpush2.msra.mxu0 0.0
        %315 = vmatprep.subr.mxu0 0.0
        %316 = vmatpush2.msra.mxu0 0.0
        %317 = vmatprep.subr.mxu0 0.0
        %318 = vmatpush2.msra.mxu0 0.0
        %319 = vmatprep.subr.mxu0 0.0
        %320 = vmatpush2.msra.mxu0 0.0
        %321 = vmatprep.subr.mxu0 0.0
        %322 = vmatpush2.msra.mxu0 0.0
        %323 = vmatprep.subr.mxu0 0.0
        %324 = vmatpush2.msra.mxu0 0.0
        %325 = vmatprep.subr.mxu0 0.0
        %326 = vmatpush2.msra.mxu0 0.0
        %327 = vmatprep.subr.mxu0 0.0
        %328 = vmatpush2.msra.mxu0 0.0
        %329 = vmatprep.subr.mxu0 0.0
        %330 = vmatpush2.msra.mxu0 0.0
        %331 = vmatprep.subr.mxu0 0.0
        %332 = vmatpush2.msra.mxu0 0.0
        %333 = vmatprep.subr.mxu0 0.0
        %334 = vmatpush2.msra.mxu0 0.0
        %335 = vmatprep.subr.mxu0 0.0
        %336 = vmatpush2.msra.mxu0 0.0
        %337 = vmatprep.subr.mxu0 0.0
        %338 = vmatpush2.msra.mxu0 0.0
        %339 = vmatprep.subr.mxu0 0.0
        %340 = vmatpush2.msra.mxu0 0.0
        %341 = vmatprep.subr.mxu0 0.0
        %342 = vmatpush2.msra.mxu0 0.0
        %343 = vmatprep.mubr.f32.mxu0 0.0
        %344 = vmatmul.mubr.f32.gmra.mxu0 %v256
        %v345 = vpop.f32.mrf.mxu0
        %v346 = vadd.f32 %v217, %v345
        %v347 = vpop.f32.mrf.mxu0
        %348 = vmatprep.mubr.f32.mxu0 0.0
        %349 = vmatmul.mubr.f32.gmra.mxu0 %v259
        %v350 = vpop.f32.mrf.mxu0
        %v351 = vadd.f32 %v222, %v350
        %v352 = vpop.f32.mrf.mxu0
        %353 = vmatprep.mubr.f32.mxu0 0.0
        %354 = vmatmul.mubr.f32.gmra.mxu0 %v262
        %v355 = vpop.f32.mrf.mxu0
        %v356 = vadd.f32 %v227, %v355
        %v357 = vpop.f32.mrf.mxu0
        %358 = vmatprep.mubr.f32.mxu0 0.0
        %359 = vmatmul.mubr.f32.gmra.mxu0 %v265
        %v360 = vpop.f32.mrf.mxu0
        %v361 = vadd.f32 %v232, %v360
        %v362 = vpop.f32.mrf.mxu0
        %363 = vmatprep.mubr.f32.mxu0 0.0
        %364 = vmatmul.mubr.f32.gmra.mxu0 %v268
        %v365 = vpop.f32.mrf.mxu0
        %v366 = vadd.f32 %v237, %v365
        %v367 = vpop.f32.mrf.mxu0
        %368 = vmatprep.mubr.f32.mxu0 0.0
        %369 = vmatmul.mubr.f32.gmra.mxu0 %v271
        %v370 = vpop.f32.mrf.mxu0
        %v371 = vadd.f32 %v242, %v370
        %v372 = vpop.f32.mrf.mxu0
        %373 = vmatprep.mubr.f32.mxu0 0.0
        %374 = vmatmul.mubr.f32.gmra.mxu0 %v274
        %v375 = vpop.f32.mrf.mxu0
        %v376 = vadd.f32 %v247, %v375
        %v377 = vpop.f32.mrf.mxu0
        %378 = vmatprep.mubr.f32.mxu0 0.0
        %379 = vmatmul.mubr.f32.gmra.mxu0 %v277
        %v380 = vpop.f32.mrf.mxu0
        %v381 = vadd.f32 %v252, %v380
        %v382 = vpop.f32.mrf.mxu0
        %383 = vdwg.mxu0
        %384 = vst [vmem:[%s185] sm:$0xff] %v346
        %385 = vst [vmem:[%s185 + $0x8] sm:$0xff] %v351
        %386 = vst [vmem:[%s185 + $0x10] sm:$0xff] %v356
        %387 = vst [vmem:[%s185 + $0x18] sm:$0xff] %v361
        %388 = vst [vmem:[%s185 + $0x20] sm:$0xff] %v366
        %389 = vst [vmem:[%s185 + $0x28] sm:$0xff] %v371
        %390 = vst [vmem:[%s185 + $0x30] sm:$0xff] %v376
        %391 = vst [vmem:[%s185 + $0x38] sm:$0xff] %v381
        %s392 = sand.u32 %s109, 1
        %s393 = scalar_lea.sflag [#allocation3], %s392
        %s394 = sand.u32 %s109, 1
        %s395 = smul.addr %s394, 64
        %s396 = scalar_lea.vmem [#allocation2], %s395
        // Predicated region
        $region33: #{tpu_custom_call.1} parent=31 // pred_check
          %p397 = pneg %p119
        $region34: #{tpu_custom_call.1} parent=31 // pred_check_branch
          %399 = sbr.rel (%p397) target = $region36
        $region35: #{tpu_custom_call.1} parent=31 // pred_region
          %s401 = ssub.s32 1024, 1024
          %402 = vsyncadd %s393, %s401
          %s403 = smul.addr %s21, 8
          %s404 = sadd.s32 %s22, %s403
          %s405 = smul.addr %s404, 128
          %s406 = scalar_lea.hbm %s3, %s405
          %s407 = sshll.u32 %s396, 4
          %s408 = int_to_ptr.vmem [resolvable:$true] %s407
          %413 = dma.vmem_to_hbm [thread:$0]  %s408, 1024, %s406, %s393, 128, 128, 8
        $region36: #{tpu_custom_call.1} parent=31 // pred_fallthru
          _
      $region32: #{tpu_custom_call.1} parent=5 // pred_fallthru
        _
      %p414 = scmp.le.s32.totalorder 2, %s12
      // Predicated region
      $region37: #{tpu_custom_call.1} parent=5 // pred_check
        %p415 = pneg %p414
      $region38: #{tpu_custom_call.1} parent=5 // pred_check_branch
        %417 = sbr.rel (%p415) target = $region40
      $region39: #{tpu_custom_call.1} parent=5 // pred_region
        %s418 = ssub.s32 %s12, 2
        // Predicated region
        $region41: #{tpu_custom_call.1} parent=39 // pred_check
          %p419 = pneg %p125
        $region42: #{tpu_custom_call.1} parent=39 // pred_check_branch
          %421 = sbr.rel (%p419) target = $region44
        $region43: #{tpu_custom_call.1} parent=39 // pred_region
          %s422 = sand.u32 %s110, 1
          %s423 = scalar_lea.sflag [#allocation3], %s422
          %s424 = sand.u32 %s110, 1
          %s425 = smul.addr %s424, 64
          %s426 = scalar_lea.vmem [#allocation2], %s425
          %427 = dma.done %s423, 1024
        $region44: #{tpu_custom_call.1} parent=39 // pred_fallthru
          _
      $region40: #{tpu_custom_call.1} parent=5 // pred_fallthru
        _
    $region6: #{tpu_custom_call.1} parent=1 // loop_footer
      %s16 = sadd.s32 1, %s12
    $region7: #{tpu_custom_call.1} parent=1 // loop_footer_branch
      %11 = sbr.rel target = $region3
    $region8: #{tpu_custom_call.1} parent=1 // loop_exit
      _
    %428 = vsyncpa [#allocation3], 1
    %s429 = scalar_lea.sflag [#allocation3], 1
    %430 = vsyncpa %s429, 1

// kernel: tpu_custom_call.1
$region0: #{tpu_custom_call.1}
  #allocation0 [shape = 'u32[]', space=smem, size = 0x4, offset = 0x4, fixed_abs, tag = 'smem constant byte address 0x4 - core index']
  #allocation1 [shape = 'u32[144,128]{1,0:T(1,128)}', space=vmem, size = 0x12000, scoped, tag = 'internal scratch']
  %s0 = inlined_call_operand.vmem [shape: f32[64,32], index: 0, kind: input, shape index: {}]
  %s1 = inlined_call_operand.vmem [shape: f32[2,32,128], index: 1, kind: input, shape index: {}]
  %s2 = inlined_call_operand.vmem [shape: f32[64,1], index: 2, kind: input, shape index: {}]
  %s3 = inlined_call_operand.hbm [shape: f32[2,64,128], index: 3, kind: output, shape index: {}]
  %s4 = sld [smem:[#allocation0]]
  $region45: #{tpu_custom_call.1} parent=0
    _
  %s6 = ssub.s32 1, %s4
  %s7 = scalar_select 0, %s6, %s4
  $region1: #{tpu_custom_call.1} parent=0
    #allocation2 [shape = 'u8[65536]{0}', space=vmem, size = 0x10000, scoped, tag = 'output window, operand 0']
    #allocation3 [shape = 's32[2]{0}', space=sflag, size = 0x8, scoped, tag = 'scoped memory for tpu_custom_call.1']
    %8 = vsyncpa [#allocation3], 0
    %s9 = scalar_lea.sflag [#allocation3], 1
    %10 = vsyncpa %s9, 0
    loop: start=0, step=1, limit=4
    $region2: #{tpu_custom_call.1} parent=1 // loop_pre_header
      _
    $region3: #{tpu_custom_call.1} parent=1 // loop_header
      %s12 = sphi 0, %s16
      %p13 = scmp.ge.s32.totalorder %s12, 4
      %s19 = sphi 0, %s31
      %s20 = sphi 0, %s27
      %s21 = sphi 0, %s19
      %s22 = sphi 0, %s20
      %s23 = sphi 0, %s21
      %s24 = sphi 0, %s22
      %s32 = sphi 0, %s32
      %s34 = sphi 0, %s32
      %s35 = sphi 0, %s34
      %s49 = sphi 0, %s35
      %s57 = sphi 0, %s59
      %s60 = sphi 0, %s57
      %s61 = sphi 0, %s60
      %s77 = sphi 0, %s61
      %s81 = sphi 0, %s81
      %s83 = sphi 0, %s81
      %s84 = sphi 0, %s83
      %s98 = sphi 0, %s84
      %s106 = sphi 0, %s108
      %s109 = sphi 0, %s106
      %s110 = sphi 0, %s109
      %s126 = sphi 0, %s110
    $region4: #{tpu_custom_call.1} parent=1 // loop_header_branch
      %15 = sbr.rel (%p13) target = $region8
    $region5: #{tpu_custom_call.1} parent=1 // loop_body
      %s17 = ssub.s32 %s12, 1
      %s18 = ssub.s32 %s12, 2
      %s25 = sadd.s32 1, %s20
      %p26 = scmp.ge.s32.totalorder %s25, 1
      %s27 = scalar_select %p26, 0, %s25
      %s28 = sadd.s32 1, %s19
      %s29 = scalar_select %p26, %s28, %s19
      %p30 = scmp.ge.s32.totalorder %s29, 2
      %s31 = scalar_select %p30, 0, %s29
      %s33 = sadd.s32 %s32, 1
      %p36 = scmp.eq.s32.totalorder %s12, 1
      %p37 = scmp.ne.s32.totalorder %s32, %s34
      %p38 = scmp.eq.s32.totalorder %s12, 0
      %p39 = por %p37, %p38
      %p40 = scmp.ne.s32.totalorder %s32, %s34
      %p41 = scmp.eq.s32.totalorder %s17, 1
      %p42 = por %p40, %p41
      %p43 = scmp.ne.s32.totalorder %s34, %s35
      %p44 = scmp.eq.s32.totalorder %s17, 0
      %p45 = por %p43, %p44
      %p46 = scmp.ne.s32.totalorder %s34, %s35
      %p47 = scmp.eq.s32.totalorder %s18, 1
      %p48 = por %p46, %p47
      %p50 = scmp.ne.s32.totalorder %s35, %s49
      %p51 = scmp.eq.s32.totalorder %s18, 0
      %p52 = por %p50, %p51
      %s53 = ssub.s32 %s19, %s31
      %s54 = ssub.s32 %s20, %s27
      %s55 = sor.u32 %s53, %s54
      %p56 = scmp.eq.s32.totalorder %s55, 0
      %s58 = sadd.s32 %s57, 1
      %s59 = scalar_select %p56, %s57, %s58
      %p62 = pneg %p56
      %p63 = scmp.eq.s32.totalorder %s12, 1
      %p64 = por %p62, %p63
      %p65 = scmp.ne.s32.totalorder %s57, %s60
      %p66 = scmp.eq.s32.totalorder %s12, 0
      %p67 = por %p65, %p66
      %p68 = scmp.ne.s32.totalorder %s57, %s60
      %p69 = scmp.eq.s32.totalorder %s17, 1
      %p70 = por %p68, %p69
      %p71 = scmp.ne.s32.totalorder %s60, %s61
      %p72 = scmp.eq.s32.totalorder %s17, 0
      %p73 = por %p71, %p72
      %p74 = scmp.ne.s32.totalorder %s60, %s61
      %p75 = scmp.eq.s32.totalorder %s18, 1
      %p76 = por %p74, %p75
      %p78 = scmp.ne.s32.totalorder %s61, %s77
      %p79 = scmp.eq.s32.totalorder %s18, 0
      %p80 = por %p78, %p79
      %s82 = sadd.s32 %s81, 1
      %p85 = scmp.eq.s32.totalorder %s12, 1
      %p86 = scmp.ne.s32.totalorder %s81, %s83
      %p87 = scmp.eq.s32.totalorder %s12, 0
      %p88 = por %p86, %p87
      %p89 = scmp.ne.s32.totalorder %s81, %s83
      %p90 = scmp.eq.s32.totalorder %s17, 1
      %p91 = por %p89, %p90
      %p92 = scmp.ne.s32.totalorder %s83, %s84
      %p93 = scmp.eq.s32.totalorder %s17, 0
      %p94 = por %p92, %p93
      %p95 = scmp.ne.s32.totalorder %s83, %s84
      %p96 = scmp.eq.s32.totalorder %s18, 1
      %p97 = por %p95, %p96
      %p99 = scmp.ne.s32.totalorder %s84, %s98
      %p100 = scmp.eq.s32.totalorder %s18, 0
      %p101 = por %p99, %p100
      %s102 = ssub.s32 %s19, %s31
      %s103 = ssub.s32 %s20, %s27
      %s104 = sor.u32 %s102, %s103
      %p105 = scmp.eq.s32.totalorder %s104, 0
      %s107 = sadd.s32 %s106, 1
      %s108 = scalar_select %p105, %s106, %s107
      %p111 = pneg %p105
      %p112 = scmp.eq.s32.totalorder %s12, 1
      %p113 = por %p111, %p112
      %p114 = scmp.ne.s32.totalorder %s106, %s109
      %p115 = scmp.eq.s32.totalorder %s12, 0
      %p116 = por %p114, %p115
      %p117 = scmp.ne.s32.totalorder %s106, %s109
      %p118 = scmp.eq.s32.totalorder %s17, 1
      %p119 = por %p117, %p118
      %p120 = scmp.ne.s32.totalorder %s109, %s110
      %p121 = scmp.eq.s32.totalorder %s17, 0
      %p122 = por %p120, %p121
      %p123 = scmp.ne.s32.totalorder %s109, %s110
      %p124 = scmp.eq.s32.totalorder %s18, 1
      %p125 = por %p123, %p124
      %p127 = scmp.ne.s32.totalorder %s110, %s126
      %p128 = scmp.eq.s32.totalorder %s18, 0
      %p129 = por %p127, %p128
      %p130 = scmp.le.s32.totalorder 1, %s12
      %p131 = scmp.lt.s32.totalorder %s12, 3
      %p132 = pnand %p130, %p131
      %p133 = pneg %p132
      // Predicated region
      $region9: #{tpu_custom_call.1} parent=5 // pred_check
        _
      $region10: #{tpu_custom_call.1} parent=5 // pred_check_branch
        %135 = sbr.rel (%p132) target = $region12
      $region11: #{tpu_custom_call.1} parent=5 // pred_region
        %s136 = ssub.s32 %s12, 1
        // Predicated region
        $region13: #{tpu_custom_call.1} parent=11 // pred_check
          %p137 = pneg %p45
        $region14: #{tpu_custom_call.1} parent=11 // pred_check_branch
          %139 = sbr.rel (%p137) target = $region16
        $region15: #{tpu_custom_call.1} parent=11 // pred_region
          _
        $region16: #{tpu_custom_call.1} parent=11 // pred_fallthru
          _
        // Predicated region
        $region17: #{tpu_custom_call.1} parent=11 // pred_check
          %p140 = pneg %p94
        $region18: #{tpu_custom_call.1} parent=11 // pred_check_branch
          %142 = sbr.rel (%p140) target = $region20
        $region19: #{tpu_custom_call.1} parent=11 // pred_region
          _
        $region20: #{tpu_custom_call.1} parent=11 // pred_fallthru
          _
      $region12: #{tpu_custom_call.1} parent=5 // pred_fallthru
        _
      %p143 = scmp.lt.s32.totalorder %s12, 2
      // Predicated region
      $region21: #{tpu_custom_call.1} parent=5 // pred_check
        %p144 = pneg %p143
      $region22: #{tpu_custom_call.1} parent=5 // pred_check_branch
        %146 = sbr.rel (%p144) target = $region24
      $region23: #{tpu_custom_call.1} parent=5 // pred_region
        // Predicated region
        $region25: #{tpu_custom_call.1} parent=23 // pred_check
          %p147 = pneg %p67
        $region26: #{tpu_custom_call.1} parent=23 // pred_check_branch
          %149 = sbr.rel (%p147) target = $region28
        $region27: #{tpu_custom_call.1} parent=23 // pred_region
          %p150 = scmp.lt.s32.totalorder %s19, 1
          %s151 = scalar_select %p150, %s19, 1
          %p152 = scmp.lt.s32.totalorder %s20, 0
          %s153 = scalar_select %p152, %s20, 0
          %s154 = smul.addr %s151, 4
          %s155 = sadd.s32 %s153, %s154
          %s156 = smul.addr %s155, 8
          %s157 = scalar_lea.vmem %s1, %s156
        $region28: #{tpu_custom_call.1} parent=23 // pred_fallthru
          _
      $region24: #{tpu_custom_call.1} parent=5 // pred_fallthru
        _
      %p158 = scmp.le.s32.totalorder 1, %s12
      %p159 = scmp.lt.s32.totalorder %s12, 3
      %p160 = pnand %p158, %p159
      %p161 = pneg %p160
      // Predicated region
      $region29: #{tpu_custom_call.1} parent=5 // pred_check
        _
      $region30: #{tpu_custom_call.1} parent=5 // pred_check_branch
        %163 = sbr.rel (%p160) target = $region32
      $region31: #{tpu_custom_call.1} parent=5 // pred_region
        %s164 = ssub.s32 %s12, 1
        %p165 = pneg %p45
        %p166 = pneg %p42
        %p167 = scmp.lt.s32.totalorder %s21, 1
        %s168 = scalar_select %p167, %s21, 1
        %p169 = scmp.lt.s32.totalorder %s22, 0
        %s170 = scalar_select %p169, %s22, 0
        %s171 = smul.addr %s168, 4
        %s172 = sadd.s32 %s170, %s171
        %s173 = smul.addr %s172, 8
        %s174 = scalar_lea.vmem %s1, %s173
        %p175 = pneg %p73
        %p176 = pneg %p70
        %p177 = pneg %p94
        %p178 = pneg %p91
        %p179 = pneg %p122
        %p180 = pneg %p119
        %s181 = sand.u32 %s109, 1
        %s182 = scalar_lea.sflag [#allocation3], %s181
        %s183 = sand.u32 %s109, 1
        %s184 = smul.addr %s183, 64
        %s185 = scalar_lea.vmem [#allocation2], %s184
        %p186 = scmp.lt.s32.totalorder %s21, 1
        %s187 = scalar_select %p186, %s21, 1
        %p188 = scmp.lt.s32.totalorder %s22, 0
        %s189 = scalar_select %p188, %s22, 0
        %s190 = smul.addr %s187, 4
        %s191 = sadd.s32 %s189, %s190
        %s192 = smul.addr %s191, 8
        %s193 = scalar_lea.vmem %s1, %s192
        %v194 = vld [vmem:[%s0] sm:$0xff]
        %v195 = vld [vmem:[%s0 + $0x8] sm:$0xff]
        %v196 = vld [vmem:[%s0 + $0x10] sm:$0xff]
        %v197 = vld [vmem:[%s0 + $0x18] sm:$0xff]
        %v198 = vld [vmem:[%s0 + $0x20] sm:$0xff]
        %v199 = vld [vmem:[%s0 + $0x28] sm:$0xff]
        %v200 = vld [vmem:[%s0 + $0x30] sm:$0xff]
        %v201 = vld [vmem:[%s0 + $0x38] sm:$0xff]
        %v202 = vld [vmem:[%s2] sm:$0xff]
        %v203 = vld [vmem:[%s2 + $0x8] sm:$0xff]
        %v204 = vld [vmem:[%s2 + $0x10] sm:$0xff]
        %v205 = vld [vmem:[%s2 + $0x18] sm:$0xff]
        %v206 = vld [vmem:[%s2 + $0x20] sm:$0xff]
        %v207 = vld [vmem:[%s2 + $0x28] sm:$0xff]
        %v208 = vld [vmem:[%s2 + $0x30] sm:$0xff]
        %v209 = vld [vmem:[%s2 + $0x38] sm:$0xff]
        %v210 = vld [vmem:[%s193] sm:$0xff]
        %v211 = vld [vmem:[%s193 + $0x8] sm:$0xff]
        %v212 = vld [vmem:[%s193 + $0x10] sm:$0xff]
        %v213 = vld [vmem:[%s193 + $0x18] sm:$0xff]
        %215 = vset.pattern.permute.xlu0 0
        %216 = vperm.xlu0 %215, %v202
        %v217 = vpop.permute.xlu0 %216
        %220 = vset.pattern.permute.xlu0 0
        %221 = vperm.xlu0 %220, %v203
        %v222 = vpop.permute.xlu0 %221
        %225 = vset.pattern.permute.xlu0 0
        %226 = vperm.xlu0 %225, %v204
        %v227 = vpop.permute.xlu0 %226
        %230 = vset.pattern.permute.xlu0 0
        %231 = vperm.xlu0 %230, %v205
        %v232 = vpop.permute.xlu0 %231
        %235 = vset.pattern.permute.xlu0 0
        %236 = vperm.xlu0 %235, %v206
        %v237 = vpop.permute.xlu0 %236
        %240 = vset.pattern.permute.xlu0 0
        %241 = vperm.xlu0 %240, %v207
        %v242 = vpop.permute.xlu0 %241
        %245 = vset.pattern.permute.xlu0 0
        %246 = vperm.xlu0 %245, %v208
        %v247 = vpop.permute.xlu0 %246
        %250 = vset.pattern.permute.xlu0 0
        %251 = vperm.xlu0 %250, %v209
        %v252 = vpop.permute.xlu0 %251
        %vm254 = vcmask 261120
        %v256 = vsel %vm254, %v194, 0
        %v259 = vsel %vm254, %v195, 0
        %v262 = vsel %vm254, %v196, 0
        %v265 = vsel %vm254, %v197, 0
        %v268 = vsel %vm254, %v198, 0
        %v271 = vsel %vm254, %v199, 0
        %v274 = vsel %vm254, %v200, 0
        %v277 = vsel %vm254, %v201, 0
        %279 = vmatprep.subr.mxu0 0.0
        %280 = vmatpush1.msra.mxu0 0.0
        %281 = vmatprep.subr.mxu0 0.0
        %282 = vmatpush1.msra.mxu0 0.0
        %283 = vmatprep.subr.mxu0 0.0
        %284 = vmatpush1.msra.mxu0 0.0
        %285 = vmatprep.subr.mxu0 0.0
        %286 = vmatpush1.msra.mxu0 0.0
        %287 = vmatprep.subr.mxu0 0.0
        %288 = vmatpush1.msra.mxu0 0.0
        %289 = vmatprep.subr.mxu0 0.0
        %290 = vmatpush1.msra.mxu0 0.0
        %291 = vmatprep.subr.mxu0 0.0
        %292 = vmatpush1.msra.mxu0 0.0
        %293 = vmatprep.subr.mxu0 0.0
        %294 = vmatpush1.msra.mxu0 0.0
        %295 = vmatprep.subr.mxu0 0.0
        %296 = vmatpush1.msra.mxu0 0.0
        %297 = vmatprep.subr.mxu0 0.0
        %298 = vmatpush1.msra.mxu0 0.0
        %299 = vmatprep.subr.mxu0 0.0
        %300 = vmatpush1.msra.mxu0 0.0
        %301 = vmatprep.subr.mxu0 0.0
        %302 = vmatpush1.msra.mxu0 0.0
        %303 = vmatprep.subr.mxu0 0.0
        %304 = vmatpush1.msra.mxu0 %v213
        %305 = vmatprep.subr.mxu0 0.0
        %306 = vmatpush1.msra.mxu0 %v212
        %307 = vmatprep.subr.mxu0 0.0
        %308 = vmatpush1.msra.mxu0 %v211
        %309 = vmatprep.subr.mxu0 0.0
        %310 = vmatpush1.msra.mxu0 %v210
        %311 = vmatprep.subr.mxu0 0.0
        %312 = vmatpush2.msra.mxu0 0.0
        %313 = vmatprep.subr.mxu0 0.0
        %314 = vmatpush2.msra.mxu0 0.0
        %315 = vmatprep.subr.mxu0 0.0
        %316 = vmatpush2.msra.mxu0 0.0
        %317 = vmatprep.subr.mxu0 0.0
        %318 = vmatpush2.msra.mxu0 0.0
        %319 = vmatprep.subr.mxu0 0.0
        %320 = vmatpush2.msra.mxu0 0.0
        %321 = vmatprep.subr.mxu0 0.0
        %322 = vmatpush2.msra.mxu0 0.0
        %323 = vmatprep.subr.mxu0 0.0
        %324 = vmatpush2.msra.mxu0 0.0
        %325 = vmatprep.subr.mxu0 0.0
        %326 = vmatpush2.msra.mxu0 0.0
        %327 = vmatprep.subr.mxu0 0.0
        %328 = vmatpush2.msra.mxu0 0.0
        %329 = vmatprep.subr.mxu0 0.0
        %330 = vmatpush2.msra.mxu0 0.0
        %331 = vmatprep.subr.mxu0 0.0
        %332 = vmatpush2.msra.mxu0 0.0
        %333 = vmatprep.subr.mxu0 0.0
        %334 = vmatpush2.msra.mxu0 0.0
        %335 = vmatprep.subr.mxu0 0.0
        %336 = vmatpush2.msra.mxu0 0.0
        %337 = vmatprep.subr.mxu0 0.0
        %338 = vmatpush2.msra.mxu0 0.0
        %339 = vmatprep.subr.mxu0 0.0
        %340 = vmatpush2.msra.mxu0 0.0
        %341 = vmatprep.subr.mxu0 0.0
        %342 = vmatpush2.msra.mxu0 0.0
        %343 = vmatprep.mubr.f32.mxu0 0.0
        %344 = vmatmul.mubr.f32.gmra.mxu0 %v256
        %v345 = vpop.f32.mrf.mxu0
        %v346 = vadd.f32 %v217, %v345
        %v347 = vpop.f32.mrf.mxu0
        %348 = vmatprep.mubr.f32.mxu0 0.0
        %349 = vmatmul.mubr.f32.gmra.mxu0 %v259
        %v350 = vpop.f32.mrf.mxu0
        %v351 = vadd.f32 %v222, %v350
        %v352 = vpop.f32.mrf.mxu0
        %353 = vmatprep.mubr.f32.mxu0 0.0
        %354 = vmatmul.mubr.f32.gmra.mxu0 %v262
        %v355 = vpop.f32.mrf.mxu0
        %v356 = vadd.f32 %v227, %v355
        %v357 = vpop.f32.mrf.mxu0
        %358 = vmatprep.mubr.f32.mxu0 0.0
        %359 = vmatmul.mubr.f32.gmra.mxu0 %v265
        %v360 = vpop.f32.mrf.mxu0
        %v361 = vadd.f32 %v232, %v360
        %v362 = vpop.f32.mrf.mxu0
        %363 = vmatprep.mubr.f32.mxu0 0.0
        %364 = vmatmul.mubr.f32.gmra.mxu0 %v268
        %v365 = vpop.f32.mrf.mxu0
        %v366 = vadd.f32 %v237, %v365
        %v367 = vpop.f32.mrf.mxu0
        %368 = vmatprep.mubr.f32.mxu0 0.0
        %369 = vmatmul.mubr.f32.gmra.mxu0 %v271
        %v370 = vpop.f32.mrf.mxu0
        %v371 = vadd.f32 %v242, %v370
        %v372 = vpop.f32.mrf.mxu0
        %373 = vmatprep.mubr.f32.mxu0 0.0
        %374 = vmatmul.mubr.f32.gmra.mxu0 %v274
        %v375 = vpop.f32.mrf.mxu0
        %v376 = vadd.f32 %v247, %v375
        %v377 = vpop.f32.mrf.mxu0
        %378 = vmatprep.mubr.f32.mxu0 0.0
        %379 = vmatmul.mubr.f32.gmra.mxu0 %v277
        %v380 = vpop.f32.mrf.mxu0
        %v381 = vadd.f32 %v252, %v380
        %v382 = vpop.f32.mrf.mxu0
        %383 = vdwg.mxu0
        %384 = vst [vmem:[%s185] sm:$0xff] %v346
        %385 = vst [vmem:[%s185 + $0x8] sm:$0xff] %v351
        %386 = vst [vmem:[%s185 + $0x10] sm:$0xff] %v356
        %387 = vst [vmem:[%s185 + $0x18] sm:$0xff] %v361
        %388 = vst [vmem:[%s185 + $0x20] sm:$0xff] %v366
        %389 = vst [vmem:[%s185 + $0x28] sm:$0xff] %v371
        %390 = vst [vmem:[%s185 + $0x30] sm:$0xff] %v376
        %391 = vst [vmem:[%s185 + $0x38] sm:$0xff] %v381
        %s392 = sand.u32 %s109, 1
        %s393 = scalar_lea.sflag [#allocation3], %s392
        %s394 = sand.u32 %s109, 1
        %s395 = smul.addr %s394, 64
        %s396 = scalar_lea.vmem [#allocation2], %s395
        // Predicated region
        $region33: #{tpu_custom_call.1} parent=31 // pred_check
          %p397 = pneg %p119
        $region34: #{tpu_custom_call.1} parent=31 // pred_check_branch
          %399 = sbr.rel (%p397) target = $region36
        $region35: #{tpu_custom_call.1} parent=31 // pred_region
          %s401 = ssub.s32 1024, 1024
          %402 = vsyncadd %s393, %s401
          %s403 = smul.addr %s21, 8
          %s404 = sadd.s32 %s22, %s403
          %s405 = smul.addr %s404, 128
          %s406 = scalar_lea.hbm %s3, %s405
          %s407 = sshll.u32 %s396, 4
          %s408 = int_to_ptr.vmem [resolvable:$true] %s407
          %413 = dma.vmem_to_hbm [thread:$0]  %s408, 1024, %s406, %s393, 128, 128, 8
        $region36: #{tpu_custom_call.1} parent=31 // pred_fallthru
          _
      $region32: #{tpu_custom_call.1} parent=5 // pred_fallthru
        _
      %p414 = scmp.le.s32.totalorder 2, %s12
      // Predicated region
      $region37: #{tpu_custom_call.1} parent=5 // pred_check
        %p415 = pneg %p414
      $region38: #{tpu_custom_call.1} parent=5 // pred_check_branch
        %417 = sbr.rel (%p415) target = $region40
      $region39: #{tpu_custom_call.1} parent=5 // pred_region
        %s418 = ssub.s32 %s12, 2
        // Predicated region
        $region41: #{tpu_custom_call.1} parent=39 // pred_check
          %p419 = pneg %p125
        $region42: #{tpu_custom_call.1} parent=39 // pred_check_branch
          %421 = sbr.rel (%p419) target = $region44
        $region43: #{tpu_custom_call.1} parent=39 // pred_region
          %s422 = sand.u32 %s110, 1
          %s423 = scalar_lea.sflag [#allocation3], %s422
          %s424 = sand.u32 %s110, 1
          %s425 = smul.addr %s424, 64
          %s426 = scalar_lea.vmem [#allocation2], %s425
          %427 = dma.done %s423, 1024
        $region44: #{tpu_custom_call.1} parent=39 // pred_fallthru
          _
      $region40: #{tpu_custom_call.1} parent=5 // pred_fallthru
        _
    $region6: #{tpu_custom_call.1} parent=1 // loop_footer
      %s16 = sadd.s32 1, %s12
    $region7: #{tpu_custom_call.1} parent=1 // loop_footer_branch
      %11 = sbr.rel target = $region3
    $region8: #{tpu_custom_call.1} parent=1 // loop_exit
      _
    %428 = vsyncpa [#allocation3], 1
    %s429 = scalar_lea.sflag [#allocation3], 1
    %430 = vsyncpa %s429, 1

</llo_original>
